<compile_context>
chip_gen: v7x
topology: tpu7x:2x2x1
jax: 0.10.0
libtpu: 0.0.40
codegen_flags: <defaults>
</compile_context>

<pallas_src>
import jax
import jax.numpy as jnp
from jax.experimental import pallas as pl
from jax.experimental.pallas import tpu as pltpu


def _clipped_tanh_kernel(x_ref, o_ref):
    # Compute in f32 regardless of input dtype (fixes bf16 0.999 -> 1.0
    # rounding); cast back to the output dtype on store.
    x = x_ref[...].astype(jnp.float32)
    y = 0.5 * (1.0 + 0.999 * jnp.tanh(x))
    o_ref[...] = y.astype(o_ref.dtype)


def _clipped_tanh_jnp(x):
    """Tiny-tail fallback, same f32 math as the kernel."""
    y = 0.5 * (1.0 + 0.999 * jnp.tanh(x.astype(jnp.float32)))
    return y.astype(x.dtype)


_LANES = (512, 256, 128)            # lane-dense last-dim candidates
_TARGET_TILE_BYTES = 4 * 1024 * 1024  # ~4 MiB per-buffer DMA chunk (dtype-agnostic)
_MIN_GRID_STEPS = 4                 # enough steps to pipeline / feed 2 v7x TCs
_VMEM_LIMIT = 48 * 1024 * 1024


def _round_up(a, b):
    return (a + b - 1) // b * b


def _run_2d(x2d):
    """Run the elementwise kernel over a lane-dense (rows, lane) slab."""
    rows, lane = x2d.shape
    dtype = x2d.dtype

    # Byte-sized tile cap: same ~4 MiB chunk for bf16 and f32.
    cap_rows = max(8, (_TARGET_TILE_BYTES // (lane * dtype.itemsize)) // 8 * 8)
    # Guarantee >= _MIN_GRID_STEPS grid steps when possible (double-buffering,
    # and several blocks per TensorCore on v7x), without exceeding the cap.
    tr = _round_up(pl.cdiv(rows, _MIN_GRID_STEPS), 8)
    tr = min(tr, cap_rows)
    if tr >= rows:
        tr = rows  # single block == full dim (valid for any row count)
    grid = (pl.cdiv(rows, tr),)  # ragged last row-block handled by the pipeline

    return pl.pallas_call(
        _clipped_tanh_kernel,
        out_shape=jax.ShapeDtypeStruct((rows, lane), dtype),
        grid_spec=pltpu.PrefetchScalarGridSpec(
            num_scalar_prefetch=0,
            grid=grid,
            # v7x sweep candidate: pipeline_mode=pl.Buffered(3) on this spec.
            in_specs=[pl.BlockSpec((tr, lane), lambda i: (i, 0))],
            out_specs=pl.BlockSpec((tr, lane), lambda i: (i, 0)),
        ),
        compiler_params=pltpu.CompilerParams(
            dimension_semantics=("parallel",),
            vmem_limit_bytes=_VMEM_LIMIT,
        ),
    )(x2d)


def clipped_tanh(x):
    """Apply 0.5*(1 + 0.999*tanh(x)) elementwise via a Pallas TPU kernel.

    Works for any shape / float dtype. The common case (size divisible by
    128) is a zero-copy reshape to a lane-dense slab -> kernel -> reshape
    back (1 HBM read + 1 write). Only sizes that are not 128-aligned fall
    back to a bulk-kernel + tiny-jnp-tail split.
    """
    orig_shape = x.shape
    n = x.size
    if n == 0:
        return x
    x_flat = jnp.ravel(x)

    lane = next((l for l in _LANES if n % l == 0), None)
    if lane is not None:
        # Zero-copy path: free row-major reshape, no pad/unpad HBM passes.
        out2d = _run_2d(x_flat.reshape(n // lane, lane))
        return out2d.reshape(orig_shape)

    # Ragged-tail path (n not a multiple of 128): kernel on the lane-aligned
    # bulk, plain jnp on the < 512-element tail. No full-array padding pass.
    lane = _LANES[0]
    n_bulk = (n // lane) * lane
    tail_y = _clipped_tanh_jnp(x_flat[n_bulk:])
    if n_bulk == 0:
        return tail_y.reshape(orig_shape)
    bulk_y = _run_2d(x_flat[:n_bulk].reshape(n_bulk // lane, lane)).reshape(-1)
    return jnp.concatenate([bulk_y, tail_y]).reshape(orig_shape)


def clipped_tanh_ref(x):
    return 0.5 * (1.0 + 0.999 * jnp.tanh(x.astype(jnp.float32)))


if __name__ == "__main__":
    key = jax.random.PRNGKey(0)
    f = jax.jit(clipped_tanh)

    # Primary: NCHW f32 input, like the PyTorch module would receive.
    x = jax.random.normal(key, (2, 4, 16, 16), dtype=jnp.float32)
    y = jax.block_until_ready(f(x))
    assert y.shape == x.shape and y.dtype == x.dtype
    assert jnp.allclose(y, clipped_tanh_ref(x), atol=1e-6, rtol=1e-6), "f32 mismatch"

    # Unaligned size (1155 elements): exercises the bulk + jnp-tail path.
    x2 = jax.random.normal(jax.random.PRNGKey(0), (3, 5, 7, 11), dtype=jnp.float32)
    y2 = jax.block_until_ready(f(x2))
    assert y2.shape == x2.shape
    assert jnp.allclose(y2, clipped_tanh_ref(x2), atol=1e-6, rtol=1e-6), "tail-path mismatch"

    # 128-aligned but not 512-aligned: exercises the adaptive-lane path.
    x3 = jax.random.normal(jax.random.PRNGKey(0), (2, 4, 16), dtype=jnp.float32)
    y3 = jax.block_until_ready(f(x3))
    assert y3.shape == x3.shape
    assert jnp.allclose(y3, clipped_tanh_ref(x3), atol=1e-6, rtol=1e-6), "lane-path mismatch"

    # bf16 path: dtype preserved end-to-end, and the 0.999 clip must survive
    # (compute is f32 inside the kernel, so only the final bf16 cast differs).
    xb = jax.random.normal(key, (2, 4, 16, 16), dtype=jnp.bfloat16)
    yb = jax.block_until_ready(f(xb))
    assert yb.dtype == jnp.bfloat16 and yb.shape == xb.shape
    yb_ref = clipped_tanh_ref(xb).astype(jnp.bfloat16).astype(jnp.float32)
    assert jnp.allclose(yb.astype(jnp.float32), yb_ref, atol=5e-3, rtol=5e-3), "bf16 mismatch"

    print("KERNEL_OK")
</pallas_src>

<mosaic_0001>
module attributes {stable_mosaic.version = 11 : i64} {
  func.func @_clipped_tanh_kernel(%arg0: i32, %arg1: memref<4x512xf32, #tpu.memory_space<vmem>>, %arg2: memref<4x512xf32, #tpu.memory_space<vmem>>) attributes {dimension_semantics = [#tpu.dimension_semantics<parallel>], iteration_bounds = array<i64: 1>, scalar_prefetch = 0 : i64, scratch_operands = 0 : i64, tpu.core_type = #tpu.core_type<tc>, window_params = [{transform_indices = @transform_0, window_bounds = array<i64: 4, 512>}, {transform_indices = @transform_1, window_bounds = array<i64: 4, 512>}]} {
    %c0 = arith.constant 0 : index
    %c0_0 = arith.constant 0 : index
    %0 = vector.load %arg1[%c0, %c0_0] : memref<4x512xf32, #tpu.memory_space<vmem>>, vector<4x512xf32>
    %1 = math.tanh %0 : vector<4x512xf32>
    %cst = arith.constant 9.990000e-01 : f32
    %2 = vector.broadcast %cst : f32 to vector<4x512xf32>
    %3 = arith.mulf %2, %1 : vector<4x512xf32>
    %cst_1 = arith.constant 1.000000e+00 : f32
    %4 = vector.broadcast %cst_1 : f32 to vector<4x512xf32>
    %5 = arith.addf %4, %3 : vector<4x512xf32>
    %cst_2 = arith.constant 5.000000e-01 : f32
    %6 = vector.broadcast %cst_2 : f32 to vector<4x512xf32>
    %7 = arith.mulf %6, %5 : vector<4x512xf32>
    %c0_3 = arith.constant 0 : index
    %c0_4 = arith.constant 0 : index
    %8 = vector.load %arg2[%c0_3, %c0_4] : memref<4x512xf32, #tpu.memory_space<vmem>>, vector<4x512xf32>
    tpu.vector_store %arg2[%c0_3, %c0_4], %7 {strides = array<i32>} : memref<4x512xf32, #tpu.memory_space<vmem>>, vector<4x512xf32>,
    return
  }
  func.func @transform_0(%arg0: i32) -> (i32, i32) {
    %c0_i32 = arith.constant 0 : i32
    %c0_i32_0 = arith.constant 0 : i32
    return %arg0, %c0_i32 : i32, i32
  }
  func.func @transform_1(%arg0: i32) -> (i32, i32) {
    %c0_i32 = arith.constant 0 : i32
    %c0_i32_0 = arith.constant 0 : i32
    return %arg0, %c0_i32 : i32, i32
  }
}

</mosaic_0001>

<llo_original>
// kernel: clipped_tanh.1
$region0: #{clipped_tanh.1}
  #allocation0 [shape = 'u32[]', space=smem, size = 0x4, offset = 0x4, fixed_abs, tag = 'smem constant byte address 0x4 - core index']
  #allocation1 [shape = 'u32[144,128]{1,0:T(1,128)}', space=vmem, size = 0x12000, scoped, tag = 'internal scratch']
  %s0 = inlined_call_operand.vmem [shape: f32[4,512], index: 0, kind: input, shape index: {}]
  %s1 = inlined_call_operand.vmem [shape: f32[4,512], index: 1, kind: output, shape index: {}]
  %s2 = sld [smem:[#allocation0]]
  $region14: #{clipped_tanh.1} parent=0
    _
  %s4 = ssub.s32 1, %s2
  %s5 = scalar_select 0, %s4, %s2
  // Predicated region
  $region2: #{clipped_tanh.1} parent=0 // pred_check
    _
  $region3: #{clipped_tanh.1} parent=0 // pred_check_branch
    %7 = sbr.rel (0) target = $region5
  $region4: #{clipped_tanh.1} parent=0 // pred_region
    _
  $region5: #{clipped_tanh.1} parent=0 // pred_fallthru
    _
  %v8 = vld [vmem:[%s0] sm:$0xff]
  %v9 = vld [vmem:[%s0 + $0x8] sm:$0xff]
  %v10 = vtanh.pop %v8
  %v11 = vtanh.pop %v9
  %v12 = vmul.f32 %v10, 0.999
  %v13 = vmul.f32 %v11, 0.999
  %v14 = vadd.f32 %v12, 1.0
  %v15 = vadd.f32 %v13, 1.0
  %v16 = vmul.f32 %v14, 0.5
  %v17 = vmul.f32 %v15, 0.5
  %18 = vst [vmem:[%s1] sm:$0xff] %v16
  %19 = vst [vmem:[%s1 + $0x8] sm:$0xff] %v17
  // Predicated region
  $region6: #{clipped_tanh.1} parent=0 // pred_check
    _
  $region7: #{clipped_tanh.1} parent=0 // pred_check_branch
    %21 = sbr.rel (0) target = $region9
  $region8: #{clipped_tanh.1} parent=0 // pred_region
    _
  $region9: #{clipped_tanh.1} parent=0 // pred_fallthru
    _
  // Predicated region
  $region10: #{clipped_tanh.1} parent=0 // pred_check
    _
  $region11: #{clipped_tanh.1} parent=0 // pred_check_branch
    %23 = sbr.rel (0) target = $region13
  $region12: #{clipped_tanh.1} parent=0 // pred_region
    _
  $region13: #{clipped_tanh.1} parent=0 // pred_fallthru
    _

</llo_original>
